<compile_context>
chip_gen: v5e
topology: v5e:2x2
jax: 0.10.0
libtpu: 0.0.40
codegen_flags: <defaults>
</compile_context>

<pallas_src>
import jax
import jax.numpy as jnp
from jax.experimental import pallas as pl
from jax.experimental.pallas import tpu as pltpu

# Problem sizes (small, synthetic).
N = 8                     # batch
C_IN, H_IN, W_IN = 1, 16, 16
D = C_IN * H_IN * W_IN    # 256 flattened features
HID = 32                  # hidden width of each sub-model MLP
NCLS = 3                  # 3 coarse classes, 3 fine classes per sub-model
NMODELS = 4               # raw, lying_left, supine, lying_right
HID_CAT = NMODELS * HID   # 128 -> exactly one 128-lane MXU output tile
CLS_CAT = NMODELS * NCLS  # 12
TILE_N = 8                # batch tile (sublane-aligned); grid scales with N
OUT_LANES = 128           # lane-dense output block width

_MODEL_ORDER = ("raw", "lying_left", "supine", "lying_right")


def _argmax_rows(p):
    """Row-wise argmax of (n, c) -> (n, 1) int32, first index on ties."""
    n, c = p.shape
    col = jax.lax.broadcasted_iota(jnp.int32, (n, c), 1)
    row_max = jnp.max(p, axis=1, keepdims=True)
    idx = jnp.where(p >= row_max, col, jnp.int32(c))
    return jnp.min(idx, axis=1, keepdims=True)


def _end2end_kernel(x_ref, w1_ref, b1_ref, w2_ref, b2_ref, out_ref):
    x = x_ref[...]                                              # (TN, D) f32

    # Fused first layer: one (TN,256)x(256,128) matmul, output fills 128 lanes.
    h = jnp.maximum(
        jnp.dot(x, w1_ref[...], preferred_element_type=jnp.float32)
        + b1_ref[...], 0.0)                                     # (TN, 128)

    # Fused second layer: block-diagonal weights -> all 12 logits in one dot.
    logits = jnp.dot(h, w2_ref[...],
                     preferred_element_type=jnp.float32) + b2_ref[...]  # (TN, 12)

    raw = logits[:, 0 * NCLS:1 * NCLS]          # raw classifier logits
    ll = logits[:, 1 * NCLS:2 * NCLS]           # lying_left logits
    sp = logits[:, 2 * NCLS:3 * NCLS]           # supine logits
    lr = logits[:, 3 * NCLS:4 * NCLS]           # lying_right logits

    raw_pred = _argmax_rows(raw)                # (TN, 1) int32
    is0 = raw_pred == 0                         # hoisted masks, reused twice
    is1 = raw_pred == 1

    # Route: raw 0 -> lying_left, 1 -> supine, 2 -> lying_right (on logits;
    # softmax dropped -- argmax is invariant under it).
    routed = jnp.where(is0, ll, jnp.where(is1, sp, lr))         # (TN, 3)
    final = _argmax_rows(routed)                                # (TN, 1)

    # torch index_fill pair: raw==0 -> 1, raw==1 -> 0 (swap 0<->1).
    relabeled = jnp.where(is0, jnp.int32(1),
                          jnp.where(is1, jnp.int32(0), raw_pred))

    labels = (relabeled * 3 + final + 1).astype(jnp.int32)      # (TN, 1)
    # Lane-dense store: broadcast label across 128 lanes; wrapper reads col 0.
    out_ref[...] = jnp.broadcast_to(labels, out_ref.shape)


def pack_params(params):
    """Host-side packing: fused first layer + block-diagonal second layer."""
    w1 = jnp.concatenate([params[n]["w1"] for n in _MODEL_ORDER], axis=1)  # (D, 128)
    b1 = jnp.concatenate([params[n]["b1"] for n in _MODEL_ORDER], axis=1)  # (1, 128)
    w2 = jnp.zeros((HID_CAT, CLS_CAT), jnp.float32)
    for i, n in enumerate(_MODEL_ORDER):
        w2 = w2.at[i * HID:(i + 1) * HID, i * NCLS:(i + 1) * NCLS].set(
            params[n]["w2"])
    b2 = jnp.concatenate([params[n]["b2"] for n in _MODEL_ORDER], axis=1)  # (1, 12)
    return w1, b1, w2, b2


def end2end_pose_classifier(xb, packed):
    """Pallas forward. xb: (N, C, H, W) float32 NCHW. Returns (N,) int32."""
    w1, b1, w2, b2 = packed
    n = xb.shape[0]
    x2d = xb.reshape(n, -1).astype(jnp.float32)        # flatten NCHW row-major

    n_pad = pl.cdiv(n, TILE_N) * TILE_N
    if n_pad != n:
        x2d = jnp.pad(x2d, ((0, n_pad - n), (0, 0)))
    grid = (n_pad // TILE_N,)

    out = pl.pallas_call(
        _end2end_kernel,
        out_shape=jax.ShapeDtypeStruct((n_pad, OUT_LANES), jnp.int32),
        grid=grid,
        in_specs=[
            pl.BlockSpec((TILE_N, D), lambda i: (i, 0)),        # x tile
            pl.BlockSpec((D, HID_CAT), lambda i: (0, 0)),       # W1cat resident
            pl.BlockSpec((1, HID_CAT), lambda i: (0, 0)),       # b1cat resident
            pl.BlockSpec((HID_CAT, CLS_CAT), lambda i: (0, 0)),  # W2blk resident
            pl.BlockSpec((1, CLS_CAT), lambda i: (0, 0)),       # b2cat resident
        ],
        out_specs=pl.BlockSpec((TILE_N, OUT_LANES), lambda i: (i, 0)),
        compiler_params=pltpu.CompilerParams(
            dimension_semantics=("parallel",)),
    )(x2d, w1, b1, w2, b2)
    return out[:n, 0]


def reference_forward(xb, params):
    """Plain-JAX mirror of the PyTorch forward (softmax kept, dense routing)."""
    x = xb.reshape(xb.shape[0], -1).astype(jnp.float32)

    def mlp(p):
        h = jnp.maximum(x @ p["w1"] + p["b1"], 0.0)
        return jax.nn.softmax(h @ p["w2"] + p["b2"], axis=-1)

    raw = mlp(params["raw"])
    ll = mlp(params["lying_left"])
    sp = mlp(params["supine"])
    lr = mlp(params["lying_right"])

    raw_pred = jnp.argmax(raw, axis=1).astype(jnp.int32)
    rp = raw_pred[:, None]
    routed = jnp.where(rp == 0, ll, jnp.where(rp == 1, sp, lr))
    final = jnp.argmax(routed, axis=1).astype(jnp.int32)
    relabeled = jnp.where(raw_pred == 0, 1,
                          jnp.where(raw_pred == 1, 0, raw_pred)).astype(jnp.int32)
    return relabeled * 3 + final + 1


def make_params(key):
    params = {}
    keys = jax.random.split(key, 4 * len(_MODEL_ORDER))
    for i, name in enumerate(_MODEL_ORDER):
        k1, k2, k3, k4 = keys[4 * i: 4 * i + 4]
        params[name] = {
            "w1": jax.random.normal(k1, (D, HID), jnp.float32) / jnp.sqrt(D),
            "b1": jax.random.normal(k2, (1, HID), jnp.float32) * 0.1,
            "w2": jax.random.normal(k3, (HID, NCLS), jnp.float32) / jnp.sqrt(HID),
            "b2": jax.random.normal(k4, (1, NCLS), jnp.float32) * 0.1,
        }
    return params


if __name__ == "__main__":
    key = jax.random.PRNGKey(0)
    k_x, k_p = jax.random.split(key)
    xb = jax.random.normal(k_x, (N, C_IN, H_IN, W_IN), jnp.float32)
    params = make_params(k_p)
    packed = pack_params(params)

    out = end2end_pose_classifier(xb, packed)
    out = jax.block_until_ready(out)

    ref = jax.block_until_ready(reference_forward(xb, params))
    assert out.shape == (N,) and out.dtype == jnp.int32
    assert bool(jnp.all(out == ref)), (out, ref)

    print("KERNEL_OK")
</pallas_src>

<mosaic_0001>
module attributes {stable_mosaic.version = 11 : i64} {
  func.func @_end2end_kernel(%arg0: i32, %arg1: memref<8x256xf32, #tpu.memory_space<vmem>>, %arg2: memref<256x128xf32, #tpu.memory_space<vmem>>, %arg3: memref<1x128xf32, #tpu.memory_space<vmem>>, %arg4: memref<128x12xf32, #tpu.memory_space<vmem>>, %arg5: memref<1x12xf32, #tpu.memory_space<vmem>>, %arg6: memref<8x128xi32, #tpu.memory_space<vmem>>) attributes {dimension_semantics = [#tpu.dimension_semantics<parallel>], iteration_bounds = array<i64: 1>, scalar_prefetch = 0 : i64, scratch_operands = 0 : i64, tpu.core_type = #tpu.core_type<tc>, window_params = [{transform_indices = @transform_0, window_bounds = array<i64: 8, 256>}, {pipeline_mode = #tpu.pipeline_mode<synchronous>, transform_indices = @transform_1, window_bounds = array<i64: 256, 128>}, {pipeline_mode = #tpu.pipeline_mode<synchronous>, transform_indices = @transform_2, window_bounds = array<i64: 1, 128>}, {pipeline_mode = #tpu.pipeline_mode<synchronous>, transform_indices = @transform_3, window_bounds = array<i64: 128, 12>}, {pipeline_mode = #tpu.pipeline_mode<synchronous>, transform_indices = @transform_4, window_bounds = array<i64: 1, 12>}, {transform_indices = @transform_5, window_bounds = array<i64: 8, 128>}]} {
    %c0 = arith.constant 0 : index
    %c0_0 = arith.constant 0 : index
    %0 = vector.load %arg1[%c0, %c0_0] : memref<8x256xf32, #tpu.memory_space<vmem>>, vector<8x256xf32>
    %c0_1 = arith.constant 0 : index
    %c0_2 = arith.constant 0 : index
    %1 = vector.load %arg2[%c0_1, %c0_2] : memref<256x128xf32, #tpu.memory_space<vmem>>, vector<256x128xf32>
    %cst = arith.constant dense<0.000000e+00> : vector<8x128xf32>
    %2 = tpu.matmul %0, %1, %cst {dimension_numbers = #tpu.dot_dimension_numbers<[1], [0], [0], [1], [0, 0, 1, 1], [], []>} : vector<8x256xf32>, vector<256x128xf32>, vector<8x128xf32> -> vector<8x128xf32>
    %c0_3 = arith.constant 0 : index
    %c0_4 = arith.constant 0 : index
    %3 = vector.load %arg3[%c0_3, %c0_4] : memref<1x128xf32, #tpu.memory_space<vmem>>, vector<1x128xf32>
    %4 = vector.broadcast %3 : vector<1x128xf32> to vector<8x128xf32>
    %5 = arith.addf %2, %4 : vector<8x128xf32>
    %cst_5 = arith.constant 0.000000e+00 : f32
    %6 = vector.broadcast %cst_5 : f32 to vector<8x128xf32>
    %7 = arith.maximumf %5, %6 : vector<8x128xf32>
    %c0_6 = arith.constant 0 : index
    %c0_7 = arith.constant 0 : index
    %8 = vector.load %arg4[%c0_6, %c0_7] : memref<128x12xf32, #tpu.memory_space<vmem>>, vector<128x12xf32>
    %cst_8 = arith.constant dense<0.000000e+00> : vector<8x12xf32>
    %9 = tpu.matmul %7, %8, %cst_8 {dimension_numbers = #tpu.dot_dimension_numbers<[1], [0], [0], [1], [0, 0, 1, 1], [], []>} : vector<8x128xf32>, vector<128x12xf32>, vector<8x12xf32> -> vector<8x12xf32>
    %c0_9 = arith.constant 0 : index
    %c0_10 = arith.constant 0 : index
    %10 = vector.load %arg5[%c0_9, %c0_10] : memref<1x12xf32, #tpu.memory_space<vmem>>, vector<1x12xf32>
    %11 = vector.broadcast %10 : vector<1x12xf32> to vector<8x12xf32>
    %12 = arith.addf %9, %11 : vector<8x12xf32>
    %13 = vector.extract_strided_slice %12 {offsets = [0, 0], sizes = [8, 3], strides = [1, 1]} : vector<8x12xf32> to vector<8x3xf32>
    %14 = vector.extract_strided_slice %12 {offsets = [0, 3], sizes = [8, 3], strides = [1, 1]} : vector<8x12xf32> to vector<8x3xf32>
    %15 = vector.extract_strided_slice %12 {offsets = [0, 6], sizes = [8, 3], strides = [1, 1]} : vector<8x12xf32> to vector<8x3xf32>
    %16 = vector.extract_strided_slice %12 {offsets = [0, 9], sizes = [8, 3], strides = [1, 1]} : vector<8x12xf32> to vector<8x3xf32>
    %17 = tpu.iota {dimensions = array<i32: 1>} : vector<8x3xi32>
    %cst_11 = arith.constant dense<0xFF800000> : vector<8xf32>
    %18 = vector.multi_reduction <maximumf>, %13, %cst_11 [1] : vector<8x3xf32> to vector<8xf32>
    %19 = vector.shape_cast %18 : vector<8xf32> to vector<8x1xf32>
    %20 = vector.broadcast %19 : vector<8x1xf32> to vector<8x3xf32>
    %21 = arith.cmpf oge, %13, %20 : vector<8x3xf32>
    %c3_i32 = arith.constant 3 : i32
    %22 = vector.broadcast %c3_i32 : i32 to vector<8x3xi32>
    %23 = arith.select %21, %17, %22 : vector<8x3xi1>, vector<8x3xi32>
    %cst_12 = arith.constant dense<2147483647> : vector<8xi32>
    %24 = vector.multi_reduction <minsi>, %23, %cst_12 [1] : vector<8x3xi32> to vector<8xi32>
    %25 = vector.shape_cast %24 : vector<8xi32> to vector<8x1xi32>
    %c0_i32 = arith.constant 0 : i32
    %26 = vector.broadcast %c0_i32 : i32 to vector<8x1xi32>
    %27 = arith.cmpi eq, %25, %26 : vector<8x1xi32>
    %c1_i32 = arith.constant 1 : i32
    %28 = vector.broadcast %c1_i32 : i32 to vector<8x1xi32>
    %29 = arith.cmpi eq, %25, %28 : vector<8x1xi32>
    %30 = vector.shape_cast %29 : vector<8x1xi1> to vector<8x1xi1>
    %31 = vector.broadcast %30 : vector<8x1xi1> to vector<8x3xi1>
    %32 = arith.select %31, %15, %16 : vector<8x3xi1>, vector<8x3xf32>
    %33 = vector.shape_cast %27 : vector<8x1xi1> to vector<8x1xi1>
    %34 = vector.broadcast %33 : vector<8x1xi1> to vector<8x3xi1>
    %35 = arith.select %34, %14, %32 : vector<8x3xi1>, vector<8x3xf32>
    %36 = tpu.iota {dimensions = array<i32: 1>} : vector<8x3xi32>
    %cst_13 = arith.constant dense<0xFF800000> : vector<8xf32>
    %37 = vector.multi_reduction <maximumf>, %35, %cst_13 [1] : vector<8x3xf32> to vector<8xf32>
    %38 = vector.shape_cast %37 : vector<8xf32> to vector<8x1xf32>
    %39 = vector.broadcast %38 : vector<8x1xf32> to vector<8x3xf32>
    %40 = arith.cmpf oge, %35, %39 : vector<8x3xf32>
    %c3_i32_14 = arith.constant 3 : i32
    %41 = vector.broadcast %c3_i32_14 : i32 to vector<8x3xi32>
    %42 = arith.select %40, %36, %41 : vector<8x3xi1>, vector<8x3xi32>
    %cst_15 = arith.constant dense<2147483647> : vector<8xi32>
    %43 = vector.multi_reduction <minsi>, %42, %cst_15 [1] : vector<8x3xi32> to vector<8xi32>
    %44 = vector.shape_cast %43 : vector<8xi32> to vector<8x1xi32>
    %c0_i32_16 = arith.constant 0 : i32
    %45 = vector.broadcast %c0_i32_16 : i32 to vector<8x1xi32>
    %46 = arith.select %29, %45, %25 : vector<8x1xi1>, vector<8x1xi32>
    %c1_i32_17 = arith.constant 1 : i32
    %47 = vector.broadcast %c1_i32_17 : i32 to vector<8x1xi32>
    %48 = arith.select %27, %47, %46 : vector<8x1xi1>, vector<8x1xi32>
    %c3_i32_18 = arith.constant 3 : i32
    %49 = vector.broadcast %c3_i32_18 : i32 to vector<8x1xi32>
    %50 = arith.muli %48, %49 : vector<8x1xi32>
    %51 = arith.addi %50, %44 : vector<8x1xi32>
    %c1_i32_19 = arith.constant 1 : i32
    %52 = vector.broadcast %c1_i32_19 : i32 to vector<8x1xi32>
    %53 = arith.addi %51, %52 : vector<8x1xi32>
    %54 = vector.shape_cast %53 : vector<8x1xi32> to vector<8x1xi32>
    %55 = vector.broadcast %54 : vector<8x1xi32> to vector<8x128xi32>
    %c0_20 = arith.constant 0 : index
    %c0_21 = arith.constant 0 : index
    %56 = vector.load %arg6[%c0_20, %c0_21] : memref<8x128xi32, #tpu.memory_space<vmem>>, vector<8x128xi32>
    tpu.vector_store %arg6[%c0_20, %c0_21], %55 {strides = array<i32>} : memref<8x128xi32, #tpu.memory_space<vmem>>, vector<8x128xi32>,
    return
  }
  func.func @transform_0(%arg0: i32) -> (i32, i32) {
    %c0_i32 = arith.constant 0 : i32
    %c0_i32_0 = arith.constant 0 : i32
    return %arg0, %c0_i32 : i32, i32
  }
  func.func @transform_1(%arg0: i32) -> (i32, i32) {
    %c0_i32 = arith.constant 0 : i32
    %c0_i32_0 = arith.constant 0 : i32
    %c0_i32_1 = arith.constant 0 : i32
    return %c0_i32, %c0_i32_0 : i32, i32
  }
  func.func @transform_2(%arg0: i32) -> (i32, i32) {
    %c0_i32 = arith.constant 0 : i32
    %c0_i32_0 = arith.constant 0 : i32
    %c0_i32_1 = arith.constant 0 : i32
    return %c0_i32, %c0_i32_0 : i32, i32
  }
  func.func @transform_3(%arg0: i32) -> (i32, i32) {
    %c0_i32 = arith.constant 0 : i32
    %c0_i32_0 = arith.constant 0 : i32
    %c0_i32_1 = arith.constant 0 : i32
    return %c0_i32, %c0_i32_0 : i32, i32
  }
  func.func @transform_4(%arg0: i32) -> (i32, i32) {
    %c0_i32 = arith.constant 0 : i32
    %c0_i32_0 = arith.constant 0 : i32
    %c0_i32_1 = arith.constant 0 : i32
    return %c0_i32, %c0_i32_0 : i32, i32
  }
  func.func @transform_5(%arg0: i32) -> (i32, i32) {
    %c0_i32 = arith.constant 0 : i32
    %c0_i32_0 = arith.constant 0 : i32
    return %arg0, %c0_i32 : i32, i32
  }
}

</mosaic_0001>

<llo_original>
// kernel: tpu_custom_call.1
$region0: #{tpu_custom_call.1}
  #allocation0 [shape = 'u32[]', space=smem, size = 0x4, offset = 0x4, fixed_abs, tag = 'smem constant byte address 0x4 - core index']
  #allocation1 [shape = 'u32[72,128]{1,0:T(1,128)}', space=vmem, size = 0x9000, scoped, tag = 'internal scratch']
  %s0 = inlined_call_operand.vmem [shape: f32[8,256], index: 0, kind: input, shape index: {}]
  %s1 = inlined_call_operand.hbm [shape: f32[256,128], index: 1, kind: input, shape index: {}]
  %s2 = inlined_call_operand.vmem [shape: f32[1,128], index: 2, kind: input, shape index: {}]
  %s3 = inlined_call_operand.vmem [shape: f32[128,12], index: 3, kind: input, shape index: {}]
  %s4 = inlined_call_operand.vmem [shape: f32[1,12], index: 4, kind: input, shape index: {}]
  %s5 = inlined_call_operand.hbm [shape: s32[8,128], index: 5, kind: output, shape index: {}]
  %s6 = sld [smem:[#allocation0]]
  $region34: #{tpu_custom_call.1} parent=0
    _
  %s8 = ssub.s32 1, %s6
  %s9 = scalar_select 0, %s8, %s6
  $region1: #{tpu_custom_call.1} parent=0
    #allocation2 [shape = 'u8[131072]{0}', space=vmem, size = 0x20000, scoped, tag = 'input window, operand 1, single buffered']
    #allocation3 [shape = 's32[1]{0}', space=sflag, size = 0x4, scoped, tag = 'scoped memory for tpu_custom_call.1']
    #allocation4 [shape = 's32[1]{0}', space=sflag, size = 0x4, scoped, tag = 'scoped memory for tpu_custom_call.1']
    #allocation5 [shape = 'u8[4096]{0}', space=vmem, size = 0x1000, scoped, tag = 'output window, operand 0, single buffered']
    %10 = vsyncpa [#allocation3], 0
    %11 = vsyncpa [#allocation4], 0
    // Predicated region
    $region2: #{tpu_custom_call.1} parent=1 // pred_check
      _
    $region3: #{tpu_custom_call.1} parent=1 // pred_check_branch
      %13 = sbr.rel (0) target = $region5
    $region4: #{tpu_custom_call.1} parent=1 // pred_region
      _
    $region5: #{tpu_custom_call.1} parent=1 // pred_fallthru
      _
    // Predicated region
    $region6: #{tpu_custom_call.1} parent=1 // pred_check
      _
    $region7: #{tpu_custom_call.1} parent=1 // pred_check_branch
      %15 = sbr.rel (0) target = $region9
    $region8: #{tpu_custom_call.1} parent=1 // pred_region
      %17 = vsyncadd [#allocation3], 0
      %s18 = sshll.u32 %s1, 4
      %s19 = int_to_ptr.hbm [resolvable:$true] %s18
      %s20 = sshll.u32 [#allocation2], 4
      %s21 = int_to_ptr.vmem [resolvable:$true] %s20
      %26 = dma.hbm_to_vmem [thread:$0]  %s19, 4096, %s21, [#allocation3], 128, 128, 8
    $region9: #{tpu_custom_call.1} parent=1 // pred_fallthru
      _
    // Predicated region
    $region10: #{tpu_custom_call.1} parent=1 // pred_check
      _
    $region11: #{tpu_custom_call.1} parent=1 // pred_check_branch
      %28 = sbr.rel (0) target = $region13
    $region12: #{tpu_custom_call.1} parent=1 // pred_region
      _
    $region13: #{tpu_custom_call.1} parent=1 // pred_fallthru
      _
    // Predicated region
    $region14: #{tpu_custom_call.1} parent=1 // pred_check
      _
    $region15: #{tpu_custom_call.1} parent=1 // pred_check_branch
      %30 = sbr.rel (0) target = $region17
    $region16: #{tpu_custom_call.1} parent=1 // pred_region
      _
    $region17: #{tpu_custom_call.1} parent=1 // pred_fallthru
      _
    // Predicated region
    $region18: #{tpu_custom_call.1} parent=1 // pred_check
      _
    $region19: #{tpu_custom_call.1} parent=1 // pred_check_branch
      %32 = sbr.rel (0) target = $region21
    $region20: #{tpu_custom_call.1} parent=1 // pred_region
      _
    $region21: #{tpu_custom_call.1} parent=1 // pred_fallthru
      _
    // Predicated region
    $region22: #{tpu_custom_call.1} parent=1 // pred_check
      _
    $region23: #{tpu_custom_call.1} parent=1 // pred_check_branch
      %34 = sbr.rel (0) target = $region25
    $region24: #{tpu_custom_call.1} parent=1 // pred_region
      %36 = dma.done [#allocation3], 4096
    $region25: #{tpu_custom_call.1} parent=1 // pred_fallthru
      _
    %v37 = vld [vmem:[%s0] sm:$0xff]
    %v38 = vld [vmem:[%s0 + $0x8] sm:$0xff]
    %v39 = vld [vmem:[#allocation2] sm:$0xff]
    %v40 = vld [vmem:[#allocation2 + $0x8] sm:$0xff]
    %v41 = vld [vmem:[#allocation2 + $0x10] sm:$0xff]
    %v42 = vld [vmem:[#allocation2 + $0x18] sm:$0xff]
    %v43 = vld [vmem:[#allocation2 + $0x20] sm:$0xff]
    %v44 = vld [vmem:[#allocation2 + $0x28] sm:$0xff]
    %v45 = vld [vmem:[#allocation2 + $0x30] sm:$0xff]
    %v46 = vld [vmem:[#allocation2 + $0x38] sm:$0xff]
    %v47 = vld [vmem:[#allocation2 + $0x40] sm:$0xff]
    %v48 = vld [vmem:[#allocation2 + $0x48] sm:$0xff]
    %v49 = vld [vmem:[#allocation2 + $0x50] sm:$0xff]
    %v50 = vld [vmem:[#allocation2 + $0x58] sm:$0xff]
    %v51 = vld [vmem:[#allocation2 + $0x60] sm:$0xff]
    %v52 = vld [vmem:[#allocation2 + $0x68] sm:$0xff]
    %v53 = vld [vmem:[#allocation2 + $0x70] sm:$0xff]
    %v54 = vld [vmem:[#allocation2 + $0x78] sm:$0xff]
    %v55 = vld [vmem:[#allocation2 + $0x80] sm:$0xff]
    %v56 = vld [vmem:[#allocation2 + $0x88] sm:$0xff]
    %v57 = vld [vmem:[#allocation2 + $0x90] sm:$0xff]
    %v58 = vld [vmem:[#allocation2 + $0x98] sm:$0xff]
    %v59 = vld [vmem:[#allocation2 + $0xa0] sm:$0xff]
    %v60 = vld [vmem:[#allocation2 + $0xa8] sm:$0xff]
    %v61 = vld [vmem:[#allocation2 + $0xb0] sm:$0xff]
    %v62 = vld [vmem:[#allocation2 + $0xb8] sm:$0xff]
    %v63 = vld [vmem:[#allocation2 + $0xc0] sm:$0xff]
    %v64 = vld [vmem:[#allocation2 + $0xc8] sm:$0xff]
    %v65 = vld [vmem:[#allocation2 + $0xd0] sm:$0xff]
    %v66 = vld [vmem:[#allocation2 + $0xd8] sm:$0xff]
    %v67 = vld [vmem:[#allocation2 + $0xe0] sm:$0xff]
    %v68 = vld [vmem:[#allocation2 + $0xe8] sm:$0xff]
    %v69 = vld [vmem:[#allocation2 + $0xf0] sm:$0xff]
    %v70 = vld [vmem:[#allocation2 + $0xf8] sm:$0xff]
    %v71 = vld [vmem:[%s2] sm:$0x1]
    %v73 = vperm.slane %v71, 0
    %75 = vmatpush.msra.mxu0 %v54
    %76 = vmatpush.msra.mxu0 %v53
    %77 = vmatpush.msra.mxu0 %v52
    %78 = vmatpush.msra.mxu0 %v51
    %79 = vmatpush.msra.mxu0 %v50
    %80 = vmatpush.msra.mxu0 %v49
    %81 = vmatpush.msra.mxu0 %v48
    %82 = vmatpush.msra.mxu0 %v47
    %83 = vmatpush.msra.mxu0 %v46
    %84 = vmatpush.msra.mxu0 %v45
    %85 = vmatpush.msra.mxu0 %v44
    %86 = vmatpush.msra.mxu0 %v43
    %87 = vmatpush.msra.mxu0 %v42
    %88 = vmatpush.msra.mxu0 %v41
    %89 = vmatpush.msra.mxu0 %v40
    %90 = vmatpush.msra.mxu0 %v39
    %91 = vmatmul.f32.gmra.mxu0 %v37
    %v92 = vpop.f32.mrf.mxu0
    %v93 = vadd.f32 %v73, %v92
    %94 = vdwg.mxu0
    %95 = vmatpush.msra.mxu0 %v70
    %96 = vmatpush.msra.mxu0 %v69
    %97 = vmatpush.msra.mxu0 %v68
    %98 = vmatpush.msra.mxu0 %v67
    %99 = vmatpush.msra.mxu0 %v66
    %100 = vmatpush.msra.mxu0 %v65
    %101 = vmatpush.msra.mxu0 %v64
    %102 = vmatpush.msra.mxu0 %v63
    %103 = vmatpush.msra.mxu0 %v62
    %104 = vmatpush.msra.mxu0 %v61
    %105 = vmatpush.msra.mxu0 %v60
    %106 = vmatpush.msra.mxu0 %v59
    %107 = vmatpush.msra.mxu0 %v58
    %108 = vmatpush.msra.mxu0 %v57
    %109 = vmatpush.msra.mxu0 %v56
    %110 = vmatpush.msra.mxu0 %v55
    %111 = vmatmul.f32.gmra.mxu0 %v38
    %v112 = vpop.f32.mrf.mxu0
    %v113 = vadd.f32 %v93, %v112
    %114 = vdwg.mxu0
    %v115 = vmax.f32 %v113, 0.0
    %v116 = vld [vmem:[%s3] sm:$0xff]
    %v117 = vld [vmem:[%s3 + $0x8] sm:$0xff]
    %v118 = vld [vmem:[%s3 + $0x10] sm:$0xff]
    %v119 = vld [vmem:[%s3 + $0x18] sm:$0xff]
    %v120 = vld [vmem:[%s3 + $0x20] sm:$0xff]
    %v121 = vld [vmem:[%s3 + $0x28] sm:$0xff]
    %v122 = vld [vmem:[%s3 + $0x30] sm:$0xff]
    %v123 = vld [vmem:[%s3 + $0x38] sm:$0xff]
    %v124 = vld [vmem:[%s3 + $0x40] sm:$0xff]
    %v125 = vld [vmem:[%s3 + $0x48] sm:$0xff]
    %v126 = vld [vmem:[%s3 + $0x50] sm:$0xff]
    %v127 = vld [vmem:[%s3 + $0x58] sm:$0xff]
    %v128 = vld [vmem:[%s3 + $0x60] sm:$0xff]
    %v129 = vld [vmem:[%s3 + $0x68] sm:$0xff]
    %v130 = vld [vmem:[%s3 + $0x70] sm:$0xff]
    %v131 = vld [vmem:[%s3 + $0x78] sm:$0xff]
    %v132 = vld [vmem:[%s4] sm:$0x1]
    %v134 = vperm.slane %v132, 0
    %136 = vmatpush.msra.mxu0 %v131
    %137 = vmatpush.msra.mxu0 %v130
    %138 = vmatpush.msra.mxu0 %v129
    %139 = vmatpush.msra.mxu0 %v128
    %140 = vmatpush.msra.mxu0 %v127
    %141 = vmatpush.msra.mxu0 %v126
    %142 = vmatpush.msra.mxu0 %v125
    %143 = vmatpush.msra.mxu0 %v124
    %144 = vmatpush.msra.mxu0 %v123
    %145 = vmatpush.msra.mxu0 %v122
    %146 = vmatpush.msra.mxu0 %v121
    %147 = vmatpush.msra.mxu0 %v120
    %148 = vmatpush.msra.mxu0 %v119
    %149 = vmatpush.msra.mxu0 %v118
    %150 = vmatpush.msra.mxu0 %v117
    %151 = vmatpush.msra.mxu0 %v116
    %152 = vmatmul.f32.gmra.mxu0 %v115
    %v153 = vpop.f32.mrf.mxu0
    %v154 = vadd.f32 %v134, %v153
    %155 = vdwg.mxu0
    %v156 = vlaneseq
    %v157 = vand.u32 %v156, 127
    %vm158 = vcmask 23552
    %v159 = vsel %vm158, %v154, -inf
    %160 = vmax.xlane.f32.xlu0 %v159
    %v161 = vpop.xlane.xlu0 %160
    %vm162 = vcmp.ge.f32.partialorder %v154, %v161
    %v163 = vsel %vm162, %v157, 3
    %v164 = vsel %vm158, %v163, 2147483647
    %v165 = vand.u32 %v164, 65535
    %v166 = vshra.s32 %v164, 16
    %v167 = vcvt.s32.f32 %v165
    %v168 = vcvt.s32.f32 %v166
    %169 = vmin.xlane.f32.xlu0 %v168
    %v170 = vpop.xlane.xlu0 %169
    %vm171 = vcmp.eq.f32.partialorder %v168, %v170
    %v172 = vsel %vm171, %v167, inf
    %173 = vmin.xlane.f32.xlu0 %v172
    %v174 = vpop.xlane.xlu0 %173
    %v175 = vcvt.f32.s32 %v174
    %v176 = vcvt.f32.s32 %v170
    %v177 = vshll.u32 %v176, 16
    %v178 = vadd.s32 %v177, %v175
    %vm179 = vcmp.eq.s32.totalorder %v178, 0
    %vm180 = vcmp.eq.s32.totalorder %v178, 1
    %v181 = vsel %vm180, 1, 0
    %vm182 = vcmp.eq.s32.totalorder %v181, 1
    %184 = vrot.lane.b32.xlu0 %v154, 125
    %v185 = vpop.permute.xlu0 %184
    %v187 = vsel %vm182, %v154, %v185
    %v188 = vsel %vm179, 1, 0
    %vm189 = vcmp.eq.s32.totalorder %v188, 1
    %191 = vrot.lane.b32.xlu0 %v187, 125
    %v192 = vpop.permute.xlu0 %191
    %v194 = vsel %vm189, %v154, %v192
    %vm195 = vcmask 48152
    %v196 = vsel %vm195, %v194, -inf
    %197 = vmax.xlane.f32.xlu0 %v196
    %v198 = vpop.xlane.xlu0 %197
    %vm199 = vcmp.ge.f32.partialorder %v194, %v198
    %200 = vrot.lane.b32.xlu0 %v157, 3
    %v201 = vpop.permute.xlu0 %200
    %v202 = vsel %vm199, %v201, 3
    %v203 = vsel %vm195, %v202, 2147483647
    %v204 = vand.u32 %v203, 65535
    %v205 = vshra.s32 %v203, 16
    %v206 = vcvt.s32.f32 %v204
    %v207 = vcvt.s32.f32 %v205
    %208 = vmin.xlane.f32.xlu0 %v207
    %v209 = vpop.xlane.xlu0 %208
    %vm210 = vcmp.eq.f32.partialorder %v207, %v209
    %v211 = vsel %vm210, %v206, inf
    %212 = vmin.xlane.f32.xlu0 %v211
    %v213 = vpop.xlane.xlu0 %212
    %v214 = vcvt.f32.s32 %v213
    %v215 = vcvt.f32.s32 %v209
    %v216 = vshll.u32 %v215, 16
    %v217 = vadd.s32 %v216, %v214
    %v218 = vsel %vm180, 0, %v178
    %v219 = vsel %vm179, 1, %v218
    %v220 = vmul.u32 %v219, 3
    %v221 = vadd.s32 %v220, %v217
    %v222 = vadd.s32 %v221, 1
    %223 = vst [vmem:[#allocation5] sm:$0xff] %v222
    // Predicated region
    $region26: #{tpu_custom_call.1} parent=1 // pred_check
      _
    $region27: #{tpu_custom_call.1} parent=1 // pred_check_branch
      %225 = sbr.rel (0) target = $region29
    $region28: #{tpu_custom_call.1} parent=1 // pred_region
      %227 = vsyncadd [#allocation4], 0
      %s229 = sshll.u32 [#allocation5], 4
      %s230 = int_to_ptr.vmem [resolvable:$true] %s229
      %s231 = sshll.u32 %s5, 4
      %s232 = int_to_ptr.hbm [resolvable:$true] %s231
      %234 = dma.vmem_to_hbm [thread:$0]  %s230, 128, %s232, [#allocation4]
    $region29: #{tpu_custom_call.1} parent=1 // pred_fallthru
      _
    // Predicated region
    $region30: #{tpu_custom_call.1} parent=1 // pred_check
      _
    $region31: #{tpu_custom_call.1} parent=1 // pred_check_branch
      %236 = sbr.rel (0) target = $region33
    $region32: #{tpu_custom_call.1} parent=1 // pred_region
      %238 = dma.done [#allocation4], 128
    $region33: #{tpu_custom_call.1} parent=1 // pred_fallthru
      _
    %239 = vsyncpa [#allocation3], 1
    %240 = vsyncpa [#allocation4], 1

</llo_original>
